<compile_context>
chip_gen: v7x
topology: tpu7x:2x2x1
jax: 0.10.0
libtpu: 0.0.40
codegen_flags: <defaults>
</compile_context>

<pallas_src>
import jax
import jax.numpy as jnp
import numpy as np
from jax.experimental import pallas as pl
from jax.experimental.pallas import tpu as pltpu

KH = KW = 3            # kernel_size=3, padding=1
BN_EPS = 1e-5          # PyTorch BatchNorm2d default eps
NEG_SLOPE = 0.2        # LeakyReLU negative_slope


def _default_vmem_limit():
    # ~half of physical VMEM: 32 MiB on v7x (64 MiB), 64 MiB on v5e/v6e (128 MiB).
    try:
        cap = pltpu.get_tpu_info().vmem_capacity_bytes
        return int(min(cap // 2, 96 * 1024 * 1024))
    except Exception:
        return 32 * 1024 * 1024


VMEM_LIMIT = _default_vmem_limit()


def _pick_tile_rows(rows):
    # Largest row tile (multiple of 8 sublanes) dividing the flattened N*H row
    # axis; big tiles amortize the ~0.35 us/grid-step overhead and raise the
    # MXU M dim well past the systolic fill/drain cost.
    for tr in (512, 256, 128, 64, 32, 16, 8):
        if rows % tr == 0:
            return tr
    return rows


def _conv_stats_kernel(x_ref, w_ref, y_ref, stats_ref):
    """Pass 1: 3x3 conv for one row tile (single MXU matmul) + partial BN stats.

    x_ref:     (TR, KH*Wp*Cin)     bf16  kh-shifted padded rows, lane-concatenated
    w_ref:     (KH*Wp*Cin, W*Cout) bf16  banded conv weights (grid-invariant)
    y_ref:     (TR, W*Cout)        bf16  conv output tile (lane dense)
    stats_ref: (1, 2, W*Cout)      f32   per-tile [sum; sum of squares]
    """
    acc = jnp.dot(x_ref[...], w_ref[...], preferred_element_type=jnp.float32)
    y_ref[...] = acc.astype(y_ref.dtype)

    # Single-pass statistics from the f32 accumulator (before the bf16 downcast).
    # NOTE: E[x^2]-E[x]^2 in f32 is fine at this scale; a shifted two-pass
    # formulation would be more robust for very large-mean activations.
    s = jnp.sum(acc, axis=0, keepdims=True)           # (1, W*Cout)
    ss = jnp.sum(acc * acc, axis=0, keepdims=True)    # (1, W*Cout)
    stats_ref[0] = jnp.concatenate([s, ss], axis=0)


def _bn_lrelu_kernel(y_ref, scale_ref, shift_ref, o_ref):
    """Pass 2: y * scale + shift (folded training-mode BN) then LeakyReLU(0.2)."""
    z = y_ref[...].astype(jnp.float32) * scale_ref[...] + shift_ref[...]
    o_ref[...] = jnp.where(z >= 0, z, NEG_SLOPE * z).astype(o_ref.dtype)


def _build_banded_weights(w_oihw, wp, w):
    """Banded matrix B with B[(kh*Wp + wp_)*Cin + ci, w_*Cout + co] =
    W[co, ci, kh, wp_-w_] when 0 <= wp_-w_ < KW, else 0.
    Folds kh, kw and Cin into one MXU K dimension."""
    cout, cin = w_oihw.shape[0], w_oihw.shape[1]
    wt = jnp.transpose(w_oihw, (2, 3, 1, 0)).astype(jnp.float32)   # (KH,KW,Cin,Cout)
    kw_idx = jnp.arange(wp)[:, None] - jnp.arange(w)[None, :]      # (Wp, W)
    valid = (kw_idx >= 0) & (kw_idx < KW)
    b = wt[:, jnp.clip(kw_idx, 0, KW - 1)]                         # (KH,Wp,W,Cin,Cout)
    b = jnp.where(valid[None, :, :, None, None], b, 0.0)
    b = jnp.transpose(b, (0, 1, 3, 2, 4)).reshape(KH * wp * cin, w * cout)
    return b.astype(jnp.bfloat16)


@jax.jit
def conv_block_forward(x_nchw, w_oihw, bias, gamma, beta):
    """PyTorch-convention ConvBlock forward: x (N,Cin,H,W), w (Cout,Cin,KH,KW)."""
    # Conv bias cancels exactly under training-mode BN (the batch mean absorbs
    # any per-channel constant), so it is intentionally not added anywhere.
    del bias

    n, cin, h, w = x_nchw.shape
    cout = w_oihw.shape[0]
    hp, wp = h + KH - 1, w + KW - 1
    k_dim, wc = KH * wp * cin, w * cout
    rows = n * h

    # The banded scheme targets the small-W*C regime; its weight block scales
    # ~W^2*Cin*Cout and its FLOPs ~W/3 vs a direct conv.
    if wc > 4096 or k_dim > 4096:
        # TODO(synk): fall back to per-tap K=W*Cin matmuls (pltpu.roll-shifted
        # inputs), or a direct per-tap matmul once C >= 128 lanes.
        raise NotImplementedError("banded conv path is tuned for small W*C")

    tile_r = _pick_tile_rows(rows)
    n_t = rows // tile_r

    # ---- wrapper-side layout prep, all in bf16 (NCHW only at API boundary) ---
    x_nhwc = jnp.transpose(x_nchw.astype(jnp.bfloat16), (0, 2, 3, 1))
    x_pad = jnp.pad(x_nhwc, ((0, 0), (1, 1), (1, 1), (0, 0)))       # padding=1
    x_flat = x_pad.reshape(n, hp, wp * cin)
    # kh-shifted row views concatenated along the lane axis: every kernel
    # operand is a plain Blocked tile and the conv is ONE lane-dense matmul.
    x_rows = jnp.concatenate([x_flat[:, kh:kh + h, :] for kh in range(KH)],
                             axis=-1).reshape(rows, k_dim)           # (N*H, K)

    w_banded = _build_banded_weights(w_oihw, wp, w)                  # (K, WC)

    cost = pl.CostEstimate(
        flops=int(2 * rows * k_dim * wc),
        transcendentals=0,
        bytes_accessed=int(x_rows.size * 2 + w_banded.size * 2
                           + rows * wc * 2 + n_t * 2 * wc * 4),
    )

    # ---- pass 1: conv (single K = KH*Wp*Cin matmul) + per-tile BN stats ------
    conv_out, tile_stats = pl.pallas_call(
        _conv_stats_kernel,
        grid=(n_t,),
        in_specs=[
            pl.BlockSpec((tile_r, k_dim), lambda t: (t, 0)),
            # Grid-invariant weights: on v7x this would be single-buffered
            # (pipeline_mode=pl.Buffered(1)) once W*C grows; default here.
            pl.BlockSpec((k_dim, wc), lambda t: (0, 0)),
        ],
        out_specs=(
            pl.BlockSpec((tile_r, wc), lambda t: (t, 0)),
            pl.BlockSpec((1, 2, wc), lambda t: (t, 0, 0)),
        ),
        out_shape=(
            jax.ShapeDtypeStruct((rows, wc), jnp.bfloat16),
            jax.ShapeDtypeStruct((n_t, 2, wc), jnp.float32),
        ),
        compiler_params=pltpu.CompilerParams(
            dimension_semantics=("parallel",),
            vmem_limit_bytes=VMEM_LIMIT,
        ),
        cost_estimate=cost,
    )(x_rows, w_banded)

    # ---- global BN statistics (tiny reduction) + folded scale/shift ----------
    sums = tile_stats.reshape(n_t, 2, w, cout).sum(axis=(0, 2))      # (2, Cout)
    count = n * h * w
    mean = sums[0] / count
    var = sums[1] / count - mean * mean      # biased variance (training-mode BN)
    inv_std = jax.lax.rsqrt(var + BN_EPS)
    scale = gamma.astype(jnp.float32) * inv_std
    shift = beta.astype(jnp.float32) - mean * scale
    scale_vec = jnp.tile(scale, w).reshape(1, wc)
    shift_vec = jnp.tile(shift, w).reshape(1, wc)

    # ---- pass 2: normalize + LeakyReLU, in place over the bf16 conv buffer ---
    # (input_output_aliases destroys the pre-BN conv activation; fine for a
    #  pure forward pass.)
    out_rows = pl.pallas_call(
        _bn_lrelu_kernel,
        grid=(n_t,),
        in_specs=[
            pl.BlockSpec((tile_r, wc), lambda t: (t, 0)),
            pl.BlockSpec((1, wc), lambda t: (0, 0)),
            pl.BlockSpec((1, wc), lambda t: (0, 0)),
        ],
        out_specs=pl.BlockSpec((tile_r, wc), lambda t: (t, 0)),
        out_shape=jax.ShapeDtypeStruct((rows, wc), jnp.bfloat16),
        input_output_aliases={0: 0},
        compiler_params=pltpu.CompilerParams(
            dimension_semantics=("parallel",),
            vmem_limit_bytes=VMEM_LIMIT,
        ),
    )(conv_out, scale_vec, shift_vec)

    # Back to PyTorch NCHW/f32 only at the API boundary; an NHWC end-to-end
    # pipeline would keep the lane-dense (N*H, W*Cout) layout and skip this
    # extra output-sized memory pass.
    out = out_rows.reshape(n, h, w, cout).astype(jnp.float32)
    return jnp.transpose(out, (0, 3, 1, 2))


def reference_forward(x, w, b, gamma, beta):
    """Pure-JAX f32 reference mirroring the PyTorch forward (training-mode BN)."""
    y = jax.lax.conv_general_dilated(
        x, w, window_strides=(1, 1), padding=((1, 1), (1, 1)),
        dimension_numbers=("NCHW", "OIHW", "NCHW"))
    y = y + b.reshape(1, -1, 1, 1)
    mean = y.mean(axis=(0, 2, 3), keepdims=True)
    var = ((y - mean) ** 2).mean(axis=(0, 2, 3), keepdims=True)
    y = (y - mean) / jnp.sqrt(var + BN_EPS)
    y = y * gamma.reshape(1, -1, 1, 1) + beta.reshape(1, -1, 1, 1)
    return jnp.where(y >= 0, y, NEG_SLOPE * y)


if __name__ == "__main__":
    in_channels, out_channels = 4, 8
    N, H, W = 2, 16, 16

    key = jax.random.PRNGKey(0)
    kx, kw = jax.random.split(key)

    x = jax.random.normal(kx, (N, in_channels, H, W), dtype=jnp.float32)

    # init_weights(): kaiming_normal_(fan_out, leaky_relu) / bias=0 / bn=(1,0)
    fan_out = out_channels * KH * KW
    std = np.sqrt(2.0) / np.sqrt(fan_out)
    conv_w = std * jax.random.normal(
        kw, (out_channels, in_channels, KH, KW), dtype=jnp.float32)
    conv_b = jnp.zeros((out_channels,), jnp.float32)
    bn_gamma = jnp.ones((out_channels,), jnp.float32)
    bn_beta = jnp.zeros((out_channels,), jnp.float32)

    out = jax.block_until_ready(
        conv_block_forward(x, conv_w, conv_b, bn_gamma, bn_beta))
    ref = jax.block_until_ready(
        reference_forward(x, conv_w, conv_b, bn_gamma, bn_beta))

    assert out.shape == (N, out_channels, H, W)
    # bf16 MXU operands + bf16 intermediates (f32 accumulation / f32 BN stats)
    # vs. an all-f32 reference -> compare at a few-percent tolerance.
    np.testing.assert_allclose(np.asarray(out), np.asarray(ref),
                               rtol=5e-2, atol=5e-2)

    print("KERNEL_OK")
</pallas_src>

<mosaic_0001>
module attributes {stable_mosaic.version = 11 : i64} {
  func.func @_conv_stats_kernel(%arg0: i32, %arg1: memref<32x216xbf16, #tpu.memory_space<vmem>>, %arg2: memref<216x128xbf16, #tpu.memory_space<vmem>>, %arg3: memref<32x128xbf16, #tpu.memory_space<vmem>>, %arg4: memref<1x2x128xf32, #tpu.memory_space<vmem>>) attributes {dimension_semantics = [#tpu.dimension_semantics<parallel>], iteration_bounds = array<i64: 1>, scalar_prefetch = 0 : i64, scratch_operands = 0 : i64, tpu.core_type = #tpu.core_type<tc>, window_params = [{transform_indices = @transform_0, window_bounds = array<i64: 32, 216>}, {pipeline_mode = #tpu.pipeline_mode<synchronous>, transform_indices = @transform_1, window_bounds = array<i64: 216, 128>}, {transform_indices = @transform_2, window_bounds = array<i64: 32, 128>}, {transform_indices = @transform_3, window_bounds = array<i64: 1, 2, 128>}]} {
    %c0 = arith.constant 0 : index
    %c0_0 = arith.constant 0 : index
    %0 = vector.load %arg1[%c0, %c0_0] : memref<32x216xbf16, #tpu.memory_space<vmem>>, vector<32x216xbf16>
    %c0_1 = arith.constant 0 : index
    %c0_2 = arith.constant 0 : index
    %1 = vector.load %arg2[%c0_1, %c0_2] : memref<216x128xbf16, #tpu.memory_space<vmem>>, vector<216x128xbf16>
    %cst = arith.constant dense<0.000000e+00> : vector<32x128xf32>
    %2 = tpu.matmul %0, %1, %cst {dimension_numbers = #tpu.dot_dimension_numbers<[1], [0], [0], [1], [0, 0, 1, 1], [], []>} : vector<32x216xbf16>, vector<216x128xbf16>, vector<32x128xf32> -> vector<32x128xf32>
    %3 = arith.truncf %2 : vector<32x128xf32> to vector<32x128xbf16>
    %c0_3 = arith.constant 0 : index
    %c0_4 = arith.constant 0 : index
    %4 = vector.load %arg3[%c0_3, %c0_4] : memref<32x128xbf16, #tpu.memory_space<vmem>>, vector<32x128xbf16>
    tpu.vector_store %arg3[%c0_3, %c0_4], %3 {strides = array<i32>} : memref<32x128xbf16, #tpu.memory_space<vmem>>, vector<32x128xbf16>,
    %cst_5 = arith.constant dense<0.000000e+00> : vector<128xf32>
    %5 = vector.multi_reduction <add>, %2, %cst_5 [0] : vector<32x128xf32> to vector<128xf32>
    %6 = vector.shape_cast %5 : vector<128xf32> to vector<1x128xf32>
    %7 = arith.mulf %2, %2 : vector<32x128xf32>
    %cst_6 = arith.constant dense<0.000000e+00> : vector<128xf32>
    %8 = vector.multi_reduction <add>, %7, %cst_6 [0] : vector<32x128xf32> to vector<128xf32>
    %9 = vector.shape_cast %8 : vector<128xf32> to vector<1x128xf32>
    %10 = tpu.concatenate %6, %9 in 0 : vector<1x128xf32>, vector<1x128xf32> -> vector<2x128xf32>
    %c0_7 = arith.constant 0 : index
    %c0_8 = arith.constant 0 : index
    %c0_9 = arith.constant 0 : index
    %11 = vector.load %arg4[%c0_7, %c0_8, %c0_9] : memref<1x2x128xf32, #tpu.memory_space<vmem>>, vector<1x2x128xf32>
    %12 = vector.shape_cast %11 : vector<1x2x128xf32> to vector<2x128xf32>
    %13 = vector.shape_cast %10 : vector<2x128xf32> to vector<1x2x128xf32>
    tpu.vector_store %arg4[%c0_7, %c0_8, %c0_9], %13 {strides = array<i32>} : memref<1x2x128xf32, #tpu.memory_space<vmem>>, vector<1x2x128xf32>,
    return
  }
  func.func @transform_0(%arg0: i32) -> (i32, i32) {
    %c0_i32 = arith.constant 0 : i32
    %c0_i32_0 = arith.constant 0 : i32
    return %arg0, %c0_i32 : i32, i32
  }
  func.func @transform_1(%arg0: i32) -> (i32, i32) {
    %c0_i32 = arith.constant 0 : i32
    %c0_i32_0 = arith.constant 0 : i32
    %c0_i32_1 = arith.constant 0 : i32
    return %c0_i32, %c0_i32_0 : i32, i32
  }
  func.func @transform_2(%arg0: i32) -> (i32, i32) {
    %c0_i32 = arith.constant 0 : i32
    %c0_i32_0 = arith.constant 0 : i32
    return %arg0, %c0_i32 : i32, i32
  }
  func.func @transform_3(%arg0: i32) -> (i32, i32, i32) {
    %c0_i32 = arith.constant 0 : i32
    %c0_i32_0 = arith.constant 0 : i32
    %c0_i32_1 = arith.constant 0 : i32
    return %arg0, %c0_i32, %c0_i32_0 : i32, i32, i32
  }
}

module attributes {stable_mosaic.version = 11 : i64} {
  func.func @_bn_lrelu_kernel(%arg0: i32, %arg1: memref<32x128xbf16, #tpu.memory_space<vmem>>, %arg2: memref<1x128xf32, #tpu.memory_space<vmem>>, %arg3: memref<1x128xf32, #tpu.memory_space<vmem>>, %arg4: memref<32x128xbf16, #tpu.memory_space<vmem>>) attributes {dimension_semantics = [#tpu.dimension_semantics<parallel>], iteration_bounds = array<i64: 1>, scalar_prefetch = 0 : i64, scratch_operands = 0 : i64, tpu.core_type = #tpu.core_type<tc>, window_params = [{transform_indices = @transform_0, window_bounds = array<i64: 32, 128>}, {pipeline_mode = #tpu.pipeline_mode<synchronous>, transform_indices = @transform_1, window_bounds = array<i64: 1, 128>}, {pipeline_mode = #tpu.pipeline_mode<synchronous>, transform_indices = @transform_2, window_bounds = array<i64: 1, 128>}, {transform_indices = @transform_3, window_bounds = array<i64: 32, 128>}]} {
    %c0 = arith.constant 0 : index
    %c0_0 = arith.constant 0 : index
    %0 = vector.load %arg1[%c0, %c0_0] : memref<32x128xbf16, #tpu.memory_space<vmem>>, vector<32x128xbf16>
    %1 = arith.extf %0 : vector<32x128xbf16> to vector<32x128xf32>
    %c0_1 = arith.constant 0 : index
    %c0_2 = arith.constant 0 : index
    %2 = vector.load %arg2[%c0_1, %c0_2] : memref<1x128xf32, #tpu.memory_space<vmem>>, vector<1x128xf32>
    %3 = vector.broadcast %2 : vector<1x128xf32> to vector<32x128xf32>
    %4 = arith.mulf %1, %3 : vector<32x128xf32>
    %c0_3 = arith.constant 0 : index
    %c0_4 = arith.constant 0 : index
    %5 = vector.load %arg3[%c0_3, %c0_4] : memref<1x128xf32, #tpu.memory_space<vmem>>, vector<1x128xf32>
    %6 = vector.broadcast %5 : vector<1x128xf32> to vector<32x128xf32>
    %7 = arith.addf %4, %6 : vector<32x128xf32>
    %cst = arith.constant 0.000000e+00 : f32
    %8 = vector.broadcast %cst : f32 to vector<32x128xf32>
    %9 = arith.cmpf oge, %7, %8 : vector<32x128xf32>
    %cst_5 = arith.constant 2.000000e-01 : f32
    %10 = vector.broadcast %cst_5 : f32 to vector<32x128xf32>
    %11 = arith.mulf %10, %7 : vector<32x128xf32>
    %12 = arith.select %9, %7, %11 : vector<32x128xi1>, vector<32x128xf32>
    %13 = arith.truncf %12 : vector<32x128xf32> to vector<32x128xbf16>
    %c0_6 = arith.constant 0 : index
    %c0_7 = arith.constant 0 : index
    %14 = vector.load %arg4[%c0_6, %c0_7] : memref<32x128xbf16, #tpu.memory_space<vmem>>, vector<32x128xbf16>
    tpu.vector_store %arg4[%c0_6, %c0_7], %13 {strides = array<i32>} : memref<32x128xbf16, #tpu.memory_space<vmem>>, vector<32x128xbf16>,
    return
  }
  func.func @transform_0(%arg0: i32) -> (i32, i32) {
    %c0_i32 = arith.constant 0 : i32
    %c0_i32_0 = arith.constant 0 : i32
    return %arg0, %c0_i32 : i32, i32
  }
  func.func @transform_1(%arg0: i32) -> (i32, i32) {
    %c0_i32 = arith.constant 0 : i32
    %c0_i32_0 = arith.constant 0 : i32
    %c0_i32_1 = arith.constant 0 : i32
    return %c0_i32, %c0_i32_0 : i32, i32
  }
  func.func @transform_2(%arg0: i32) -> (i32, i32) {
    %c0_i32 = arith.constant 0 : i32
    %c0_i32_0 = arith.constant 0 : i32
    %c0_i32_1 = arith.constant 0 : i32
    return %c0_i32, %c0_i32_0 : i32, i32
  }
  func.func @transform_3(%arg0: i32) -> (i32, i32) {
    %c0_i32 = arith.constant 0 : i32
    %c0_i32_0 = arith.constant 0 : i32
    return %arg0, %c0_i32 : i32, i32
  }
}

</mosaic_0001>

<llo_original>
// kernel: conv_block_forward.2
$region0: #{conv_block_forward.2}
  #allocation0 [shape = 'u32[]', space=smem, size = 0x4, offset = 0x4, fixed_abs, tag = 'smem constant byte address 0x4 - core index']
  #allocation1 [shape = 'u32[144,128]{1,0:T(1,128)}', space=vmem, size = 0x12000, scoped, tag = 'internal scratch']
  %s0 = inlined_call_operand.vmem [shape: bf16[32,216], index: 0, kind: input, shape index: {}]
  %s1 = inlined_call_operand.vmem [shape: bf16[216,128], index: 1, kind: input, shape index: {}]
  %s2 = inlined_call_operand.vmem [shape: bf16[32,128], index: 2, kind: output, shape index: {0}]
  %s3 = inlined_call_operand.vmem [shape: f32[1,2,128], index: 3, kind: output, shape index: {1}]
  %4 = xla_tuple %s2, %s3
  %s5 = sld [smem:[#allocation0]]
  $region26: #{conv_block_forward.2} parent=0
    _
  %s7 = ssub.s32 1, %s5
  %s8 = scalar_select 0, %s7, %s5
  // Predicated region
  $region2: #{conv_block_forward.2} parent=0 // pred_check
    _
  $region3: #{conv_block_forward.2} parent=0 // pred_check_branch
    %10 = sbr.rel (0) target = $region5
  $region4: #{conv_block_forward.2} parent=0 // pred_region
    _
  $region5: #{conv_block_forward.2} parent=0 // pred_fallthru
    _
  // Predicated region
  $region6: #{conv_block_forward.2} parent=0 // pred_check
    _
  $region7: #{conv_block_forward.2} parent=0 // pred_check_branch
    %12 = sbr.rel (0) target = $region9
  $region8: #{conv_block_forward.2} parent=0 // pred_region
    _
  $region9: #{conv_block_forward.2} parent=0 // pred_fallthru
    _
  %v14 = vld [vmem:[%s0] sm:$0xff]
  %v15 = vld [vmem:[%s0 + $0x8] sm:$0xff]
  %v16 = vld [vmem:[%s0 + $0x10] sm:$0xff]
  %v17 = vld [vmem:[%s0 + $0x18] sm:$0xff]
  %v18 = vld [vmem:[%s1] sm:$0xf]
  %v19 = vld [vmem:[%s1 + $0x4] sm:$0xf]
  %v20 = vld [vmem:[%s1 + $0x8] sm:$0xf]
  %v21 = vld [vmem:[%s1 + $0xc] sm:$0xf]
  %v22 = vld [vmem:[%s1 + $0x10] sm:$0xf]
  %v23 = vld [vmem:[%s1 + $0x14] sm:$0xf]
  %v24 = vld [vmem:[%s1 + $0x18] sm:$0xf]
  %v25 = vld [vmem:[%s1 + $0x1c] sm:$0xf]
  %v26 = vld [vmem:[%s1 + $0x20] sm:$0xf]
  %v27 = vld [vmem:[%s1 + $0x24] sm:$0xf]
  %v28 = vld [vmem:[%s1 + $0x28] sm:$0xf]
  %v29 = vld [vmem:[%s1 + $0x2c] sm:$0xf]
  %v30 = vld [vmem:[%s1 + $0x30] sm:$0xf]
  %v31 = vld [vmem:[%s1 + $0x34] sm:$0xf]
  %v32 = vld [vmem:[%s1 + $0x38] sm:$0xf]
  %v33 = vld [vmem:[%s1 + $0x3c] sm:$0xf]
  %v34 = vld [vmem:[%s1 + $0x40] sm:$0xf]
  %v35 = vld [vmem:[%s1 + $0x44] sm:$0xf]
  %v36 = vld [vmem:[%s1 + $0x48] sm:$0xf]
  %v37 = vld [vmem:[%s1 + $0x4c] sm:$0xf]
  %v38 = vld [vmem:[%s1 + $0x50] sm:$0xf]
  %v39 = vld [vmem:[%s1 + $0x54] sm:$0xf]
  %v40 = vld [vmem:[%s1 + $0x58] sm:$0xf]
  %v41 = vld [vmem:[%s1 + $0x5c] sm:$0xf]
  %v42 = vld [vmem:[%s1 + $0x60] sm:$0xf]
  %v43 = vld [vmem:[%s1 + $0x64] sm:$0xf]
  %v44 = vld [vmem:[%s1 + $0x68] sm:$0xf]
  %v49 = vunpack.c.l.b16 %v14
  %v50 = vunpack.c.h.b16 %v14
  %v51 = vunpack.c.l.b16 %v15
  %v52 = vunpack.c.h.b16 %v15
  %v53 = vunpack.c.l.b16 %v16
  %v54 = vunpack.c.h.b16 %v16
  %v55 = vunpack.c.l.b16 %v17
  %v56 = vunpack.c.h.b16 %v17
  %v57 = vpack.c.b16 %v51, %v49
  %v58 = vpack.c.b16 %v52, %v50
  %v59 = vpack.c.b16 %v55, %v53
  %v60 = vpack.c.b16 %v56, %v54
  %v90 = vunpack.c.l.b16 %v18
  %v91 = vunpack.c.l.b16 %v19
  %v92 = vunpack.c.l.b16 %v20
  %v93 = vunpack.c.l.b16 %v21
  %v94 = vunpack.c.l.b16 %v22
  %v95 = vunpack.c.l.b16 %v23
  %v96 = vunpack.c.l.b16 %v24
  %v97 = vunpack.c.l.b16 %v25
  %v98 = vunpack.c.l.b16 %v26
  %v99 = vunpack.c.l.b16 %v27
  %v100 = vunpack.c.l.b16 %v28
  %v101 = vunpack.c.l.b16 %v29
  %v102 = vunpack.c.l.b16 %v30
  %v103 = vunpack.c.l.b16 %v31
  %v104 = vunpack.c.l.b16 %v32
  %v105 = vunpack.c.l.b16 %v33
  %v106 = vunpack.c.l.b16 %v34
  %v107 = vunpack.c.l.b16 %v35
  %v108 = vunpack.c.l.b16 %v36
  %v109 = vunpack.c.l.b16 %v37
  %v110 = vunpack.c.l.b16 %v38
  %v111 = vunpack.c.l.b16 %v39
  %v112 = vunpack.c.l.b16 %v40
  %v113 = vunpack.c.l.b16 %v41
  %v114 = vunpack.c.l.b16 %v42
  %v115 = vunpack.c.l.b16 %v43
  %v116 = vunpack.c.l.b16 %v44
  %v117 = vpack.c.b16 %v91, %v90
  %v118 = vpack.c.b16 %v93, %v92
  %v119 = vpack.c.b16 %v95, %v94
  %v120 = vpack.c.b16 %v97, %v96
  %v121 = vpack.c.b16 %v99, %v98
  %v122 = vpack.c.b16 %v101, %v100
  %v123 = vpack.c.b16 %v103, %v102
  %v124 = vpack.c.b16 %v105, %v104
  %v125 = vpack.c.b16 %v107, %v106
  %v126 = vpack.c.b16 %v109, %v108
  %v127 = vpack.c.b16 %v111, %v110
  %v128 = vpack.c.b16 %v113, %v112
  %v129 = vpack.c.b16 %v115, %v114
  %v130 = vpack.c.b16 %v116, %v116
  %vm144 = vcmask 719872
  %v146 = vsel %vm144, %v58, 0
  %v149 = vsel %vm144, %v60, 0
  %vm151 = vcmask 1043456
  %v153 = vsel %vm151, %v130, 0
  %155 = vmatprep.subr.bf16.mxu0 0
  %156 = vmatpush1.bf16.msra.mxu0 %v117
  %157 = vmatprep.subr.bf16.mxu0 0
  %158 = vmatpush1.bf16.msra.mxu0 %v118
  %159 = vmatprep.subr.bf16.mxu0 0
  %160 = vmatpush1.bf16.msra.mxu0 %v119
  %161 = vmatprep.subr.bf16.mxu0 0
  %162 = vmatpush1.bf16.msra.mxu0 %v120
  %163 = vmatprep.subr.bf16.mxu0 0
  %164 = vmatpush1.bf16.msra.mxu0 %v121
  %165 = vmatprep.subr.bf16.mxu0 0
  %166 = vmatpush1.bf16.msra.mxu0 %v122
  %167 = vmatprep.subr.bf16.mxu0 0
  %168 = vmatpush1.bf16.msra.mxu0 %v123
  %169 = vmatprep.subr.bf16.mxu0 0
  %170 = vmatpush1.bf16.msra.mxu0 %v124
  %171 = vmatprep.subr.bf16.mxu0 0
  %172 = vmatpush1.bf16.msra.mxu0 %v125
  %173 = vmatprep.subr.bf16.mxu0 0
  %174 = vmatpush1.bf16.msra.mxu0 %v126
  %175 = vmatprep.subr.bf16.mxu0 0
  %176 = vmatpush1.bf16.msra.mxu0 %v127
  %177 = vmatprep.subr.bf16.mxu0 0
  %178 = vmatpush1.bf16.msra.mxu0 %v128
  %179 = vmatprep.subr.bf16.mxu0 0
  %180 = vmatpush1.bf16.msra.mxu0 %v129
  %181 = vmatprep.subr.bf16.mxu0 0
  %182 = vmatpush1.bf16.msra.mxu0 %v153
  %183 = vmatprep.subr.bf16.mxu0 0
  %184 = vmatpush1.bf16.msra.mxu0 0
  %185 = vmatprep.subr.bf16.mxu0 0
  %186 = vmatpush1.bf16.msra.mxu0 0
  %187 = vmatprep.mubr.bf16.mxu0 %v146
  %188 = vmatmul.mubr.bf16.gmra.mrb[0].mxu0 %v57
  %v189 = vpop.f32.mrb[0].mxu0
  %v190 = vadd.f32 0.0, %v189
  %v191 = vpop.f32.mrb[0].mxu0
  %v192 = vpop.f32.mrb[0].mxu0
  %v193 = vadd.f32 0.0, %v192
  %v194 = vpop.f32.mrb[0].mxu0
  %195 = vmatprep.mubr.bf16.mxu0 %v149
  %196 = vmatmul.mubr.bf16.gmra.mrb[0].mxu0 %v59
  %v197 = vpop.f32.mrb[0].mxu0
  %v198 = vadd.f32 0.0, %v197
  %v199 = vpop.f32.mrb[0].mxu0
  %v200 = vpop.f32.mrb[0].mxu0
  %v201 = vadd.f32 0.0, %v200
  %v202 = vpop.f32.mrb[0].mxu0
  %203 = vdwg.mxu0
  %v204 = vpack.c.bf16 %v193, %v190
  %v205 = vpack.c.bf16 %v201, %v198
  %v208 = vunpack.c.l.b16 %v204
  %v209 = vunpack.c.h.b16 %v204
  %v210 = vunpack.c.l.b16 %v205
  %v211 = vunpack.c.h.b16 %v205
  %v212 = vpack.c.b16 %v208, %v208
  %v213 = vpack.c.b16 %v209, %v209
  %v214 = vpack.c.b16 %v210, %v210
  %v215 = vpack.c.b16 %v211, %v211
  %220 = vst [vmem:[%s2] sm:$0xf] %v212
  %221 = vst [vmem:[%s2 + $0x4] sm:$0xf] %v213
  %222 = vst [vmem:[%s2 + $0x8] sm:$0xf] %v214
  %223 = vst [vmem:[%s2 + $0xc] sm:$0xf] %v215
  %v224 = vadd.f32 %v190, %v193
  %v225 = vadd.f32 %v224, %v198
  %v226 = vadd.f32 %v225, %v201
  %v227 = vrot.slane %v226, 4
  %v228 = vadd.f32 %v226, %v227
  %v229 = vrot.slane %v228, 2
  %v230 = vadd.f32 %v228, %v229
  %v231 = vrot.slane %v230, 1
  %v232 = vadd.f32 %v230, %v231
  %v233 = vmul.f32 %v190, %v190
  %v234 = vmul.f32 %v193, %v193
  %v235 = vmul.f32 %v198, %v198
  %v236 = vmul.f32 %v201, %v201
  %v237 = vadd.f32 %v233, %v234
  %v238 = vadd.f32 %v237, %v235
  %v239 = vadd.f32 %v238, %v236
  %v240 = vrot.slane %v239, 4
  %v241 = vadd.f32 %v239, %v240
  %v242 = vrot.slane %v241, 2
  %v243 = vadd.f32 %v241, %v242
  %v244 = vrot.slane %v243, 1
  %v245 = vadd.f32 %v243, %v244
  %vm246 = vcmask 1040384
  %v247 = vsel %vm246, %v232, %v245
  %248 = vst [vmem:[%s3] sm:$0x3] %v247
  // Predicated region
  $region10: #{conv_block_forward.2} parent=0 // pred_check
    _
  $region11: #{conv_block_forward.2} parent=0 // pred_check_branch
    %250 = sbr.rel (0) target = $region13
  $region12: #{conv_block_forward.2} parent=0 // pred_region
    _
  $region13: #{conv_block_forward.2} parent=0 // pred_fallthru
    _
  // Predicated region
  $region14: #{conv_block_forward.2} parent=0 // pred_check
    _
  $region15: #{conv_block_forward.2} parent=0 // pred_check_branch
    %252 = sbr.rel (0) target = $region17
  $region16: #{conv_block_forward.2} parent=0 // pred_region
    _
  $region17: #{conv_block_forward.2} parent=0 // pred_fallthru
    _
  // Predicated region
  $region18: #{conv_block_forward.2} parent=0 // pred_check
    _
  $region19: #{conv_block_forward.2} parent=0 // pred_check_branch
    %254 = sbr.rel (0) target = $region21
  $region20: #{conv_block_forward.2} parent=0 // pred_region
    _
  $region21: #{conv_block_forward.2} parent=0 // pred_fallthru
    _
  // Predicated region
  $region22: #{conv_block_forward.2} parent=0 // pred_check
    _
  $region23: #{conv_block_forward.2} parent=0 // pred_check_branch
    %256 = sbr.rel (0) target = $region25
  $region24: #{conv_block_forward.2} parent=0 // pred_region
    _
  $region25: #{conv_block_forward.2} parent=0 // pred_fallthru
    _

// kernel: tile.18
$region0: #{tile.18}
  #allocation0 [shape = 's32[1]{0}', space=sflag, size = 0x4, scoped, tag = 'scoped memory for tile.18']
  %s0 = inlined_call_operand.vmem [shape: f32[8], index: 0, kind: input, shape index: {}]
  %s1 = inlined_call_operand.vmem [shape: f32[16,8], index: 1, kind: output, shape index: {}]
  // Predicated region
  $region2: #{tile.18} parent=0 // pred_check
    _
  $region3: #{tile.18} parent=0 // pred_check_branch
    %3 = sbr.rel (0) target = $region5
  $region4: #{tile.18} parent=0 // pred_region
    _
  $region5: #{tile.18} parent=0 // pred_fallthru
    _
  %v4 = vld [vmem:[%s0] ss:$0 sm:$0xff]
  %5 = vst [vmem:[%s1] sm:$0xff] %v4
  %s6 = scalar_lea.vmem %s1, 8
  %7 = vst [vmem:[%s6] sm:$0xff] %v4

// kernel: tile.19
$region0: #{tile.19}
  %s0 = inlined_call_operand.vmem [shape: f32[16,8], index: 0, kind: input, shape index: {}]
  %s1 = inlined_call_operand.vmem [shape: f32[1,128], index: 1, kind: output, shape index: {}]
  $region1: #{tile.19} parent=0
    #allocation0 [shape = 'u8[4096]{0}', space=vmem, size = 0x1000, scoped, tag = 'scoped mem for output reshape']
    %v2 = vld [vmem:[%s0] sm:$0x1]
    %vm3 = vcmask 64512
    %4 = vst.msk [vmem:[#allocation0] sm:$0x1] %vm3, %v2
    %s5 = scalar_lea.vmem %s0, 15
    %v6 = vld [vmem:[%s5] sm:$0x1]
    %7 = vrot.lane.b32.xlu0 %v6, 120
    %v8 = vpop.permute.xlu0 %7
    %vm9 = vcmask 1048512
    %10 = vst.msk [vmem:[#allocation0] sm:$0x1] %vm9, %v8
    %s11 = scalar_lea.vmem %s0, 14
    %v12 = vld [vmem:[%s11] sm:$0x1]
    %13 = vrot.lane.b32.xlu0 %v12, 112
    %v14 = vpop.permute.xlu0 %13
    %vm15 = vcmask 982912
    %16 = vst.msk [vmem:[#allocation0] sm:$0x1] %vm15, %v14
    %s17 = scalar_lea.vmem %s0, 13
    %v18 = vld [vmem:[%s17] sm:$0x1]
    %19 = vrot.lane.b32.xlu0 %v18, 104
    %v20 = vpop.permute.xlu0 %19
    %vm21 = vcmask 917312
    %22 = vst.msk [vmem:[#allocation0] sm:$0x1] %vm21, %v20
    %s23 = scalar_lea.vmem %s0, 12
    %v24 = vld [vmem:[%s23] sm:$0x1]
    %25 = vrot.lane.b32.xlu0 %v24, 96
    %v26 = vpop.permute.xlu0 %25
    %vm27 = vcmask 851712
    %28 = vst.msk [vmem:[#allocation0] sm:$0x1] %vm27, %v26
    %s29 = scalar_lea.vmem %s0, 11
    %v30 = vld [vmem:[%s29] sm:$0x1]
    %31 = vrot.lane.b32.xlu0 %v30, 88
    %v32 = vpop.permute.xlu0 %31
    %vm33 = vcmask 786112
    %34 = vst.msk [vmem:[#allocation0] sm:$0x1] %vm33, %v32
    %s35 = scalar_lea.vmem %s0, 10
    %v36 = vld [vmem:[%s35] sm:$0x1]
    %37 = vrot.lane.b32.xlu0 %v36, 80
    %v38 = vpop.permute.xlu0 %37
    %vm39 = vcmask 720512
    %40 = vst.msk [vmem:[#allocation0] sm:$0x1] %vm39, %v38
    %s41 = scalar_lea.vmem %s0, 9
    %v42 = vld [vmem:[%s41] sm:$0x1]
    %43 = vrot.lane.b32.xlu0 %v42, 72
    %v44 = vpop.permute.xlu0 %43
    %vm45 = vcmask 654912
    %46 = vst.msk [vmem:[#allocation0] sm:$0x1] %vm45, %v44
    %s47 = scalar_lea.vmem %s0, 8
    %v48 = vld [vmem:[%s47] sm:$0x1]
    %49 = vrot.lane.b32.xlu0 %v48, 64
    %v50 = vpop.permute.xlu0 %49
    %vm51 = vcmask 589312
    %52 = vst.msk [vmem:[#allocation0] sm:$0x1] %vm51, %v50
    %s53 = scalar_lea.vmem %s0, 7
    %v54 = vld [vmem:[%s53] sm:$0x1]
    %55 = vrot.lane.b32.xlu0 %v54, 56
    %v56 = vpop.permute.xlu0 %55
    %vm57 = vcmask 523712
    %58 = vst.msk [vmem:[#allocation0] sm:$0x1] %vm57, %v56
    %s59 = scalar_lea.vmem %s0, 6
    %v60 = vld [vmem:[%s59] sm:$0x1]
    %61 = vrot.lane.b32.xlu0 %v60, 48
    %v62 = vpop.permute.xlu0 %61
    %vm63 = vcmask 458112
    %64 = vst.msk [vmem:[#allocation0] sm:$0x1] %vm63, %v62
    %s65 = scalar_lea.vmem %s0, 5
    %v66 = vld [vmem:[%s65] sm:$0x1]
    %67 = vrot.lane.b32.xlu0 %v66, 40
    %v68 = vpop.permute.xlu0 %67
    %vm69 = vcmask 392512
    %70 = vst.msk [vmem:[#allocation0] sm:$0x1] %vm69, %v68
    %s71 = scalar_lea.vmem %s0, 4
    %v72 = vld [vmem:[%s71] sm:$0x1]
    %73 = vrot.lane.b32.xlu0 %v72, 32
    %v74 = vpop.permute.xlu0 %73
    %vm75 = vcmask 326912
    %76 = vst.msk [vmem:[#allocation0] sm:$0x1] %vm75, %v74
    %s77 = scalar_lea.vmem %s0, 3
    %v78 = vld [vmem:[%s77] sm:$0x1]
    %79 = vrot.lane.b32.xlu0 %v78, 24
    %v80 = vpop.permute.xlu0 %79
    %vm81 = vcmask 261312
    %82 = vst.msk [vmem:[#allocation0] sm:$0x1] %vm81, %v80
    %s83 = scalar_lea.vmem %s0, 2
    %v84 = vld [vmem:[%s83] sm:$0x1]
    %85 = vrot.lane.b32.xlu0 %v84, 16
    %v86 = vpop.permute.xlu0 %85
    %vm87 = vcmask 195712
    %88 = vst.msk [vmem:[#allocation0] sm:$0x1] %vm87, %v86
    %s89 = scalar_lea.vmem %s0, 1
    %v90 = vld [vmem:[%s89] sm:$0x1]
    %91 = vrot.lane.b32.xlu0 %v90, 8
    %v92 = vpop.permute.xlu0 %91
    %vm93 = vcmask 130112
    %94 = vst.msk [vmem:[#allocation0] sm:$0x1] %vm93, %v92
    %s96 = sshllo.u32 0, 1
    %v98 = vld [vmem:[#allocation0] sm:%s96]
    %s99 = sshllo.u32 0, 1
    %100 = vst [vmem:[%s1] sm:%s99] %v98

// kernel: conv_block_forward.3
$region0: #{conv_block_forward.3}
  #allocation0 [shape = 'u32[]', space=smem, size = 0x4, offset = 0x4, fixed_abs, tag = 'smem constant byte address 0x4 - core index']
  #allocation1 [shape = 'u32[144,128]{1,0:T(1,128)}', space=vmem, size = 0x12000, scoped, tag = 'internal scratch']
  %s0 = inlined_call_operand.vmem [shape: bf16[32,128], index: 0, kind: input, shape index: {}, may-alias: {0,3}]
  %s1 = inlined_call_operand.vmem [shape: f32[1,128], index: 1, kind: input, shape index: {}]
  %s2 = inlined_call_operand.vmem [shape: f32[1,128], index: 2, kind: input, shape index: {}]
  %s3 = inlined_call_operand.vmem [shape: bf16[32,128], index: 3, kind: output, shape index: {}, may-alias: {0,3}]
  %s4 = sld [smem:[#allocation0]]
  $region22: #{conv_block_forward.3} parent=0
    _
  %s6 = ssub.s32 1, %s4
  %s7 = scalar_select 0, %s6, %s4
  // Predicated region
  $region2: #{conv_block_forward.3} parent=0 // pred_check
    _
  $region3: #{conv_block_forward.3} parent=0 // pred_check_branch
    %9 = sbr.rel (0) target = $region5
  $region4: #{conv_block_forward.3} parent=0 // pred_region
    _
  $region5: #{conv_block_forward.3} parent=0 // pred_fallthru
    _
  // Predicated region
  $region6: #{conv_block_forward.3} parent=0 // pred_check
    _
  $region7: #{conv_block_forward.3} parent=0 // pred_check_branch
    %11 = sbr.rel (0) target = $region9
  $region8: #{conv_block_forward.3} parent=0 // pred_region
    _
  $region9: #{conv_block_forward.3} parent=0 // pred_fallthru
    _
  // Predicated region
  $region10: #{conv_block_forward.3} parent=0 // pred_check
    _
  $region11: #{conv_block_forward.3} parent=0 // pred_check_branch
    %13 = sbr.rel (0) target = $region13
  $region12: #{conv_block_forward.3} parent=0 // pred_region
    _
  $region13: #{conv_block_forward.3} parent=0 // pred_fallthru
    _
  %v14 = vld [vmem:[%s0] sm:$0xf]
  %v15 = vld [vmem:[%s0 + $0x4] sm:$0xf]
  %v16 = vld [vmem:[%s0 + $0x8] sm:$0xf]
  %v17 = vld [vmem:[%s0 + $0xc] sm:$0xf]
  %v18 = vunpack.c.l.bf16 %v14
  %v19 = vunpack.c.l.bf16 %v15
  %v20 = vunpack.c.l.bf16 %v16
  %v21 = vunpack.c.l.bf16 %v17
  %v22 = vld [vmem:[%s1] sm:$0x1]
  %v24 = vlaneseq
  %v25 = vshrl.u32 %v24, 7
  %v26 = vsub.s32 0, %v25
  %v27 = vrot.slane %v22, %v26
  %v29 = vmul.f32 %v18, %v27
  %v30 = vmul.f32 %v19, %v27
  %v31 = vmul.f32 %v20, %v27
  %v32 = vmul.f32 %v21, %v27
  %v33 = vld [vmem:[%s2] sm:$0x1]
  %v35 = vlaneseq
  %v36 = vshrl.u32 %v35, 7
  %v37 = vsub.s32 0, %v36
  %v38 = vrot.slane %v33, %v37
  %v40 = vadd.f32 %v29, %v38
  %v41 = vadd.f32 %v30, %v38
  %v42 = vadd.f32 %v31, %v38
  %v43 = vadd.f32 %v32, %v38
  %vm44 = vcmp.ge.f32.partialorder %v40, 0.0
  %vm45 = vcmp.ge.f32.partialorder %v41, 0.0
  %vm46 = vcmp.ge.f32.partialorder %v42, 0.0
  %vm47 = vcmp.ge.f32.partialorder %v43, 0.0
  %v48 = vmul.f32 %v40, 0.2
  %v49 = vmul.f32 %v41, 0.2
  %v50 = vmul.f32 %v42, 0.2
  %v51 = vmul.f32 %v43, 0.2
  %v52 = vsel %vm44, %v40, %v48
  %v53 = vsel %vm45, %v41, %v49
  %v54 = vsel %vm46, %v42, %v50
  %v55 = vsel %vm47, %v43, %v51
  %v56 = vpack.c.bf16 %v53, %v52
  %v57 = vpack.c.bf16 %v55, %v54
  %v60 = vunpack.c.l.b16 %v56
  %v61 = vunpack.c.h.b16 %v56
  %v62 = vunpack.c.l.b16 %v57
  %v63 = vunpack.c.h.b16 %v57
  %v64 = vpack.c.b16 %v60, %v60
  %v65 = vpack.c.b16 %v61, %v61
  %v66 = vpack.c.b16 %v62, %v62
  %v67 = vpack.c.b16 %v63, %v63
  %72 = vst [vmem:[%s3] sm:$0xf] %v64
  %73 = vst [vmem:[%s3 + $0x4] sm:$0xf] %v65
  %74 = vst [vmem:[%s3 + $0x8] sm:$0xf] %v66
  %75 = vst [vmem:[%s3 + $0xc] sm:$0xf] %v67
  // Predicated region
  $region14: #{conv_block_forward.3} parent=0 // pred_check
    _
  $region15: #{conv_block_forward.3} parent=0 // pred_check_branch
    %77 = sbr.rel (0) target = $region17
  $region16: #{conv_block_forward.3} parent=0 // pred_region
    _
  $region17: #{conv_block_forward.3} parent=0 // pred_fallthru
    _
  // Predicated region
  $region18: #{conv_block_forward.3} parent=0 // pred_check
    _
  $region19: #{conv_block_forward.3} parent=0 // pred_check_branch
    %79 = sbr.rel (0) target = $region21
  $region20: #{conv_block_forward.3} parent=0 // pred_region
    _
  $region21: #{conv_block_forward.3} parent=0 // pred_fallthru
    _

</llo_original>
